<compile_context>
chip_gen: v5e
topology: v5e:2x2
jax: 0.10.0
libtpu: 0.0.40
codegen_flags: <defaults>
</compile_context>

<pallas_src>
import functools

import jax
import jax.numpy as jnp
from jax.experimental import pallas as pl
from jax.experimental.pallas import tpu as pltpu

_ACTS = ("softplus", "relu", "leaky_relu")


# ----------------------------------------------------------------------------
# Fused MLP kernel: y = Linear_{n-1}(act(... act(Linear_0(x)) ...))
# ----------------------------------------------------------------------------
def _mlp_fused_kernel(*refs, act: str, n_layers: int):
    x_ref = refs[0]
    o_ref = refs[-1]

    y = x_ref[...]  # native dtype -> MXU consumes it directly
    for li in range(n_layers):
        w_ref = refs[1 + 2 * li]
        b_ref = refs[2 + 2 * li]
        w = w_ref[...]
        b = b_ref[...]

        # MXU matmul with f32 accumulation; bias add in f32.
        y = jnp.dot(y, w, preferred_element_type=jnp.float32)
        y = y + b.astype(jnp.float32)

        if li < n_layers - 1:
            if act == "relu":
                y = jnp.maximum(y, 0.0)
            elif act == "leaky_relu":
                # PyTorch default negative_slope = 0.01
                y = jnp.where(y >= 0.0, y, 0.01 * y)
            elif act == "softplus":
                # Numerically stable softplus (beta=1).
                y = jnp.logaddexp(y, 0.0)
            # back to param dtype so the next matmul runs at native MXU rate
            y = y.astype(w.dtype)

    o_ref[...] = y.astype(o_ref.dtype)


# ----------------------------------------------------------------------------
# Tile / VMEM sizing helpers.
# ----------------------------------------------------------------------------
def _choose_tile_b(B: int, dims, itemsize: int) -> int:
    """Pick a batch tile: VMEM-bounded, <=512 rows, 8-aligned, >=2 grid steps
    when the batch is large enough (v7x megacore)."""
    if B <= 8:
        return B
    w_bytes = 2 * itemsize * sum(di * do + do for di, do in dims)  # 2x buffered
    d_in, d_out = dims[0][0], dims[-1][1]
    d_max = max([d_in] + [do for _, do in dims])
    per_row = 2 * itemsize * (d_in + d_out) + 4 * d_max  # x/out tiles + f32 temp
    budget = 24 << 20  # conservative across v5e / v6e / v7x scoped VMEM
    cap = max(8, int(max(budget - w_bytes, 1 << 20) // per_row) // 8 * 8)
    cap = min(cap, 512)  # ~512-row tiles already reach ~85% of HBM roofline

    tb = min(cap, ((B + 7) // 8) * 8)
    if tb >= B and B >= 16:
        # Split so at least 2 grid programs exist (v7x: 2 TensorCores/chip).
        tb = (((B + 1) // 2) + 7) // 8 * 8
    return max(8, min(tb, cap))


def _vmem_limit_bytes(tile_b: int, dims, itemsize: int) -> int:
    d_in, d_out = dims[0][0], dims[-1][1]
    d_max = max([d_in] + [do for _, do in dims])
    need = (2 * itemsize * tile_b * (d_in + d_out)          # x/out, double buffered
            + 2 * itemsize * sum(di * do + do for di, do in dims)  # weights + bias
            + 2 * 4 * tile_b * d_max)                        # f32 intermediates
    return int(min(max(2 * need, 16 << 20), 48 << 20))


# ----------------------------------------------------------------------------
# Parameter construction (mirrors nn.Linear shapes / default init).
# ----------------------------------------------------------------------------
def init_mlp_params(key, input_dimension, nb_layers, embedding_dimension,
                    output_dimension, dtype=jnp.float32):
    """Returns list of (W, b) with W: [in, out], b: [1, out]."""
    if nb_layers == 1:
        dims = [(input_dimension, output_dimension)]
    else:
        dims = [(input_dimension, embedding_dimension)]
        dims += [(embedding_dimension, embedding_dimension)] * (nb_layers - 2)
        dims += [(embedding_dimension, output_dimension)]

    params = []
    for (d_in, d_out) in dims:
        key, kw, kb = jax.random.split(key, 3)
        bound = 1.0 / float(d_in) ** 0.5  # PyTorch Linear default init range
        w = jax.random.uniform(kw, (d_in, d_out), dtype, -bound, bound)
        b = jax.random.uniform(kb, (1, d_out), dtype, -bound, bound)
        params.append((w, b))
    return params


# ----------------------------------------------------------------------------
# Forward pass: one fused pallas_call for the whole MLP.
# ----------------------------------------------------------------------------
def mlp_forward(x, params, activ: str = "relu"):
    if activ not in _ACTS:
        raise ValueError(f"Unknown activation: {activ}")

    B, D_in = x.shape
    n_layers = len(params)
    dims = [(w.shape[0], w.shape[1]) for w, _ in params]
    assert dims[0][0] == D_in, "input dim mismatch"
    D_out = dims[-1][1]
    itemsize = jnp.dtype(x.dtype).itemsize

    tile_b = _choose_tile_b(B, dims, itemsize)
    n_blocks = pl.cdiv(B, tile_b)
    B_pad = n_blocks * tile_b
    x_p = x if B_pad == B else jnp.pad(x, ((0, B_pad - B), (0, 0)))

    # BlockSpecs: batch-tiled activations; full (VMEM-resident) weights/biases.
    in_specs = [pl.BlockSpec((tile_b, D_in), lambda i: (i, 0))]
    flat_params = []
    for (w, b) in params:
        di, do = w.shape
        in_specs.append(pl.BlockSpec((di, do), lambda i: (0, 0)))
        in_specs.append(pl.BlockSpec((1, do), lambda i: (0, 0)))
        flat_params += [w, b]
    out_spec = pl.BlockSpec((tile_b, D_out), lambda i: (i, 0))

    # Cost estimate for XLA scheduling.
    flops = 2 * B_pad * sum(di * do for di, do in dims)
    transcend = (B_pad * sum(do for _, do in dims[:-1])
                 if (activ == "softplus" and n_layers > 1) else 0)
    bytes_acc = (x_p.size * itemsize
                 + sum(w.size * w.dtype.itemsize + b.size * b.dtype.itemsize
                       for w, b in params)
                 + B_pad * D_out * itemsize)

    kernel = functools.partial(_mlp_fused_kernel, act=activ, n_layers=n_layers)

    out = pl.pallas_call(
        kernel,
        out_shape=jax.ShapeDtypeStruct((B_pad, D_out), x.dtype),
        grid_spec=pltpu.PrefetchScalarGridSpec(
            num_scalar_prefetch=0,
            grid=(n_blocks,),
            in_specs=in_specs,
            out_specs=out_spec,
        ),
        compiler_params=pltpu.CompilerParams(
            dimension_semantics=("parallel",),
            vmem_limit_bytes=_vmem_limit_bytes(tile_b, dims, itemsize),
        ),
        cost_estimate=pl.CostEstimate(
            flops=int(flops),
            transcendentals=int(transcend),
            bytes_accessed=int(bytes_acc),
        ),
    )(x_p, *flat_params)

    return out[:B] if B_pad != B else out


# NOTE: `forward_partition` of the original module is just batch chunking;
# the batch-tiled grid above subsumes it (padding handles ragged batches).


# ----------------------------------------------------------------------------
# Pure-JAX reference.
# ----------------------------------------------------------------------------
def _mlp_reference(x, params, activ):
    y = x
    n = len(params)
    for li, (w, b) in enumerate(params):
        y = y @ w + b
        if li < n - 1:
            if activ == "relu":
                y = jnp.maximum(y, 0.0)
            elif activ == "leaky_relu":
                y = jnp.where(y >= 0.0, y, 0.01 * y)
            elif activ == "softplus":
                y = jnp.logaddexp(y, 0.0)
    return y


# ----------------------------------------------------------------------------
# Demo / smoke test.
# ----------------------------------------------------------------------------
if __name__ == "__main__":
    batch = 8
    input_dimension = 16
    nb_layers = 3
    embedding_dimension = 32
    output_dimension = 8
    activ = "relu"

    key = jax.random.PRNGKey(0)
    key, kx = jax.random.split(key)
    x = jax.random.normal(kx, (batch, input_dimension), jnp.float32)

    params = init_mlp_params(key, input_dimension, nb_layers,
                             embedding_dimension, output_dimension)

    out = jax.block_until_ready(mlp_forward(x, params, activ))
    ref = _mlp_reference(x, params, activ)
    assert out.shape == (batch, output_dimension)
    assert jnp.allclose(out, ref, atol=1e-5, rtol=1e-5)

    # 1-layer path (pure Linear, no activation).
    params1 = init_mlp_params(jax.random.PRNGKey(1), input_dimension, 1,
                              embedding_dimension, output_dimension)
    out1 = jax.block_until_ready(mlp_forward(x, params1, "relu"))
    assert jnp.allclose(out1, _mlp_reference(x, params1, "relu"),
                        atol=1e-5, rtol=1e-5)

    # Ragged batch (exercises padding + >=2 grid programs) with softplus.
    kx2 = jax.random.PRNGKey(2)
    x2 = jax.random.normal(kx2, (20, input_dimension), jnp.float32)
    out2 = jax.block_until_ready(mlp_forward(x2, params, "softplus"))
    assert jnp.allclose(out2, _mlp_reference(x2, params, "softplus"),
                        atol=1e-5, rtol=1e-5)

    print("KERNEL_OK")
</pallas_src>

<mosaic_0001>
module attributes {stable_mosaic.version = 11 : i64} {
  func.func @_mlp_fused_kernel(%arg0: i32, %arg1: memref<8x16xf32, #tpu.memory_space<vmem>>, %arg2: memref<16x32xf32, #tpu.memory_space<vmem>>, %arg3: memref<1x32xf32, #tpu.memory_space<vmem>>, %arg4: memref<32x32xf32, #tpu.memory_space<vmem>>, %arg5: memref<1x32xf32, #tpu.memory_space<vmem>>, %arg6: memref<32x8xf32, #tpu.memory_space<vmem>>, %arg7: memref<1x8xf32, #tpu.memory_space<vmem>>, %arg8: memref<8x8xf32, #tpu.memory_space<vmem>>) attributes {dimension_semantics = [#tpu.dimension_semantics<parallel>], iteration_bounds = array<i64: 1>, scalar_prefetch = 0 : i64, scratch_operands = 0 : i64, tpu.core_type = #tpu.core_type<tc>, window_params = [{transform_indices = @transform_0, window_bounds = array<i64: 8, 16>}, {pipeline_mode = #tpu.pipeline_mode<synchronous>, transform_indices = @transform_1, window_bounds = array<i64: 16, 32>}, {pipeline_mode = #tpu.pipeline_mode<synchronous>, transform_indices = @transform_2, window_bounds = array<i64: 1, 32>}, {pipeline_mode = #tpu.pipeline_mode<synchronous>, transform_indices = @transform_3, window_bounds = array<i64: 32, 32>}, {pipeline_mode = #tpu.pipeline_mode<synchronous>, transform_indices = @transform_4, window_bounds = array<i64: 1, 32>}, {pipeline_mode = #tpu.pipeline_mode<synchronous>, transform_indices = @transform_5, window_bounds = array<i64: 32, 8>}, {pipeline_mode = #tpu.pipeline_mode<synchronous>, transform_indices = @transform_6, window_bounds = array<i64: 1, 8>}, {transform_indices = @transform_7, window_bounds = array<i64: 8, 8>}]} {
    %c0 = arith.constant 0 : index
    %c0_0 = arith.constant 0 : index
    %0 = vector.load %arg1[%c0, %c0_0] : memref<8x16xf32, #tpu.memory_space<vmem>>, vector<8x16xf32>
    %c0_1 = arith.constant 0 : index
    %c0_2 = arith.constant 0 : index
    %1 = vector.load %arg2[%c0_1, %c0_2] : memref<16x32xf32, #tpu.memory_space<vmem>>, vector<16x32xf32>
    %c0_3 = arith.constant 0 : index
    %c0_4 = arith.constant 0 : index
    %2 = vector.load %arg3[%c0_3, %c0_4] : memref<1x32xf32, #tpu.memory_space<vmem>>, vector<1x32xf32>
    %cst = arith.constant dense<0.000000e+00> : vector<8x32xf32>
    %3 = tpu.matmul %0, %1, %cst {dimension_numbers = #tpu.dot_dimension_numbers<[1], [0], [0], [1], [0, 0, 1, 1], [], []>} : vector<8x16xf32>, vector<16x32xf32>, vector<8x32xf32> -> vector<8x32xf32>
    %4 = vector.broadcast %2 : vector<1x32xf32> to vector<8x32xf32>
    %5 = arith.addf %3, %4 : vector<8x32xf32>
    %cst_5 = arith.constant 0.000000e+00 : f32
    %6 = vector.broadcast %cst_5 : f32 to vector<8x32xf32>
    %7 = arith.maximumf %5, %6 : vector<8x32xf32>
    %c0_6 = arith.constant 0 : index
    %c0_7 = arith.constant 0 : index
    %8 = vector.load %arg4[%c0_6, %c0_7] : memref<32x32xf32, #tpu.memory_space<vmem>>, vector<32x32xf32>
    %c0_8 = arith.constant 0 : index
    %c0_9 = arith.constant 0 : index
    %9 = vector.load %arg5[%c0_8, %c0_9] : memref<1x32xf32, #tpu.memory_space<vmem>>, vector<1x32xf32>
    %cst_10 = arith.constant dense<0.000000e+00> : vector<8x32xf32>
    %10 = tpu.matmul %7, %8, %cst_10 {dimension_numbers = #tpu.dot_dimension_numbers<[1], [0], [0], [1], [0, 0, 1, 1], [], []>} : vector<8x32xf32>, vector<32x32xf32>, vector<8x32xf32> -> vector<8x32xf32>
    %11 = vector.broadcast %9 : vector<1x32xf32> to vector<8x32xf32>
    %12 = arith.addf %10, %11 : vector<8x32xf32>
    %cst_11 = arith.constant 0.000000e+00 : f32
    %13 = vector.broadcast %cst_11 : f32 to vector<8x32xf32>
    %14 = arith.maximumf %12, %13 : vector<8x32xf32>
    %c0_12 = arith.constant 0 : index
    %c0_13 = arith.constant 0 : index
    %15 = vector.load %arg6[%c0_12, %c0_13] : memref<32x8xf32, #tpu.memory_space<vmem>>, vector<32x8xf32>
    %c0_14 = arith.constant 0 : index
    %c0_15 = arith.constant 0 : index
    %16 = vector.load %arg7[%c0_14, %c0_15] : memref<1x8xf32, #tpu.memory_space<vmem>>, vector<1x8xf32>
    %cst_16 = arith.constant dense<0.000000e+00> : vector<8x8xf32>
    %17 = tpu.matmul %14, %15, %cst_16 {dimension_numbers = #tpu.dot_dimension_numbers<[1], [0], [0], [1], [0, 0, 1, 1], [], []>} : vector<8x32xf32>, vector<32x8xf32>, vector<8x8xf32> -> vector<8x8xf32>
    %18 = vector.broadcast %16 : vector<1x8xf32> to vector<8x8xf32>
    %19 = arith.addf %17, %18 : vector<8x8xf32>
    %c0_17 = arith.constant 0 : index
    %c0_18 = arith.constant 0 : index
    %20 = vector.load %arg8[%c0_17, %c0_18] : memref<8x8xf32, #tpu.memory_space<vmem>>, vector<8x8xf32>
    tpu.vector_store %arg8[%c0_17, %c0_18], %19 {strides = array<i32>} : memref<8x8xf32, #tpu.memory_space<vmem>>, vector<8x8xf32>,
    return
  }
  func.func @transform_0(%arg0: i32) -> (i32, i32) {
    %c0_i32 = arith.constant 0 : i32
    %c0_i32_0 = arith.constant 0 : i32
    return %arg0, %c0_i32 : i32, i32
  }
  func.func @transform_1(%arg0: i32) -> (i32, i32) {
    %c0_i32 = arith.constant 0 : i32
    %c0_i32_0 = arith.constant 0 : i32
    %c0_i32_1 = arith.constant 0 : i32
    return %c0_i32, %c0_i32_0 : i32, i32
  }
  func.func @transform_2(%arg0: i32) -> (i32, i32) {
    %c0_i32 = arith.constant 0 : i32
    %c0_i32_0 = arith.constant 0 : i32
    %c0_i32_1 = arith.constant 0 : i32
    return %c0_i32, %c0_i32_0 : i32, i32
  }
  func.func @transform_3(%arg0: i32) -> (i32, i32) {
    %c0_i32 = arith.constant 0 : i32
    %c0_i32_0 = arith.constant 0 : i32
    %c0_i32_1 = arith.constant 0 : i32
    return %c0_i32, %c0_i32_0 : i32, i32
  }
  func.func @transform_4(%arg0: i32) -> (i32, i32) {
    %c0_i32 = arith.constant 0 : i32
    %c0_i32_0 = arith.constant 0 : i32
    %c0_i32_1 = arith.constant 0 : i32
    return %c0_i32, %c0_i32_0 : i32, i32
  }
  func.func @transform_5(%arg0: i32) -> (i32, i32) {
    %c0_i32 = arith.constant 0 : i32
    %c0_i32_0 = arith.constant 0 : i32
    %c0_i32_1 = arith.constant 0 : i32
    return %c0_i32, %c0_i32_0 : i32, i32
  }
  func.func @transform_6(%arg0: i32) -> (i32, i32) {
    %c0_i32 = arith.constant 0 : i32
    %c0_i32_0 = arith.constant 0 : i32
    %c0_i32_1 = arith.constant 0 : i32
    return %c0_i32, %c0_i32_0 : i32, i32
  }
  func.func @transform_7(%arg0: i32) -> (i32, i32) {
    %c0_i32 = arith.constant 0 : i32
    %c0_i32_0 = arith.constant 0 : i32
    return %arg0, %c0_i32 : i32, i32
  }
}

</mosaic_0001>

<llo_original>
// kernel: tpu_custom_call.1
$region0: #{tpu_custom_call.1}
  #allocation0 [shape = 'u32[]', space=smem, size = 0x4, offset = 0x4, fixed_abs, tag = 'smem constant byte address 0x4 - core index']
  #allocation1 [shape = 'u32[72,128]{1,0:T(1,128)}', space=vmem, size = 0x9000, scoped, tag = 'internal scratch']
  %s0 = inlined_call_operand.vmem [shape: f32[8,16], index: 0, kind: input, shape index: {}]
  %s1 = inlined_call_operand.hbm [shape: f32[16,32], index: 1, kind: input, shape index: {}]
  %s2 = inlined_call_operand.vmem [shape: f32[1,32], index: 2, kind: input, shape index: {}]
  %s3 = inlined_call_operand.vmem [shape: f32[32,32], index: 3, kind: input, shape index: {}]
  %s4 = inlined_call_operand.vmem [shape: f32[1,32], index: 4, kind: input, shape index: {}]
  %s5 = inlined_call_operand.vmem [shape: f32[32,8], index: 5, kind: input, shape index: {}]
  %s6 = inlined_call_operand.vmem [shape: f32[1,8], index: 6, kind: input, shape index: {}]
  %s7 = inlined_call_operand.hbm [shape: f32[8,8], index: 7, kind: output, shape index: {}]
  %s8 = sld [smem:[#allocation0]]
  $region42: #{tpu_custom_call.1} parent=0
    _
  %s10 = ssub.s32 1, %s8
  %s11 = scalar_select 0, %s10, %s8
  $region1: #{tpu_custom_call.1} parent=0
    #allocation2 [shape = 'u8[8192]{0}', space=vmem, size = 0x2000, scoped, tag = 'input window, operand 1, single buffered']
    #allocation3 [shape = 's32[1]{0}', space=sflag, size = 0x4, scoped, tag = 'scoped memory for tpu_custom_call.1']
    #allocation4 [shape = 's32[1]{0}', space=sflag, size = 0x4, scoped, tag = 'scoped memory for tpu_custom_call.1']
    #allocation5 [shape = 'u8[4096]{0}', space=vmem, size = 0x1000, scoped, tag = 'output window, operand 0, single buffered']
    %12 = vsyncpa [#allocation3], 0
    %13 = vsyncpa [#allocation4], 0
    // Predicated region
    $region2: #{tpu_custom_call.1} parent=1 // pred_check
      _
    $region3: #{tpu_custom_call.1} parent=1 // pred_check_branch
      %15 = sbr.rel (0) target = $region5
    $region4: #{tpu_custom_call.1} parent=1 // pred_region
      _
    $region5: #{tpu_custom_call.1} parent=1 // pred_fallthru
      _
    // Predicated region
    $region6: #{tpu_custom_call.1} parent=1 // pred_check
      _
    $region7: #{tpu_custom_call.1} parent=1 // pred_check_branch
      %17 = sbr.rel (0) target = $region9
    $region8: #{tpu_custom_call.1} parent=1 // pred_region
      %19 = vsyncadd [#allocation3], 0
      %s20 = sshll.u32 %s1, 4
      %s21 = int_to_ptr.hbm [resolvable:$true] %s20
      %s22 = sshll.u32 [#allocation2], 4
      %s23 = int_to_ptr.vmem [resolvable:$true] %s22
      %28 = dma.hbm_to_vmem [thread:$0]  %s21, 256, %s23, [#allocation3], 128, 128, 8
    $region9: #{tpu_custom_call.1} parent=1 // pred_fallthru
      _
    // Predicated region
    $region10: #{tpu_custom_call.1} parent=1 // pred_check
      _
    $region11: #{tpu_custom_call.1} parent=1 // pred_check_branch
      %30 = sbr.rel (0) target = $region13
    $region12: #{tpu_custom_call.1} parent=1 // pred_region
      _
    $region13: #{tpu_custom_call.1} parent=1 // pred_fallthru
      _
    // Predicated region
    $region14: #{tpu_custom_call.1} parent=1 // pred_check
      _
    $region15: #{tpu_custom_call.1} parent=1 // pred_check_branch
      %32 = sbr.rel (0) target = $region17
    $region16: #{tpu_custom_call.1} parent=1 // pred_region
      _
    $region17: #{tpu_custom_call.1} parent=1 // pred_fallthru
      _
    // Predicated region
    $region18: #{tpu_custom_call.1} parent=1 // pred_check
      _
    $region19: #{tpu_custom_call.1} parent=1 // pred_check_branch
      %34 = sbr.rel (0) target = $region21
    $region20: #{tpu_custom_call.1} parent=1 // pred_region
      _
    $region21: #{tpu_custom_call.1} parent=1 // pred_fallthru
      _
    // Predicated region
    $region22: #{tpu_custom_call.1} parent=1 // pred_check
      _
    $region23: #{tpu_custom_call.1} parent=1 // pred_check_branch
      %36 = sbr.rel (0) target = $region25
    $region24: #{tpu_custom_call.1} parent=1 // pred_region
      _
    $region25: #{tpu_custom_call.1} parent=1 // pred_fallthru
      _
    // Predicated region
    $region26: #{tpu_custom_call.1} parent=1 // pred_check
      _
    $region27: #{tpu_custom_call.1} parent=1 // pred_check_branch
      %38 = sbr.rel (0) target = $region29
    $region28: #{tpu_custom_call.1} parent=1 // pred_region
      _
    $region29: #{tpu_custom_call.1} parent=1 // pred_fallthru
      _
    // Predicated region
    $region30: #{tpu_custom_call.1} parent=1 // pred_check
      _
    $region31: #{tpu_custom_call.1} parent=1 // pred_check_branch
      %40 = sbr.rel (0) target = $region33
    $region32: #{tpu_custom_call.1} parent=1 // pred_region
      %42 = dma.done [#allocation3], 256
    $region33: #{tpu_custom_call.1} parent=1 // pred_fallthru
      _
    %v43 = vld [vmem:[%s0] sm:$0xff]
    %v44 = vld [vmem:[#allocation2] sm:$0xff]
    %v45 = vld [vmem:[#allocation2 + $0x8] sm:$0xff]
    %v46 = vld [vmem:[%s2] sm:$0x1]
    %v48 = vperm.slane %v46, 0
    %vm50 = vcmask 130048
    %v52 = vsel %vm50, %v43, 0
    %54 = vmatpush.msra.mxu0 0.0
    %55 = vmatpush.msra.mxu0 0.0
    %56 = vmatpush.msra.mxu0 0.0
    %57 = vmatpush.msra.mxu0 0.0
    %58 = vmatpush.msra.mxu0 0.0
    %59 = vmatpush.msra.mxu0 0.0
    %60 = vmatpush.msra.mxu0 0.0
    %61 = vmatpush.msra.mxu0 0.0
    %62 = vmatpush.msra.mxu0 0.0
    %63 = vmatpush.msra.mxu0 0.0
    %64 = vmatpush.msra.mxu0 0.0
    %65 = vmatpush.msra.mxu0 0.0
    %66 = vmatpush.msra.mxu0 0.0
    %67 = vmatpush.msra.mxu0 0.0
    %68 = vmatpush.msra.mxu0 %v45
    %69 = vmatpush.msra.mxu0 %v44
    %70 = vmatmul.f32.gmra.mxu0 %v52
    %v71 = vpop.f32.mrf.mxu0
    %v72 = vadd.f32 %v48, %v71
    %73 = vdwg.mxu0
    %v74 = vmax.f32 %v72, 0.0
    %v75 = vld [vmem:[%s3] sm:$0xff]
    %v76 = vld [vmem:[%s3 + $0x8] sm:$0xff]
    %v77 = vld [vmem:[%s3 + $0x10] sm:$0xff]
    %v78 = vld [vmem:[%s3 + $0x18] sm:$0xff]
    %v79 = vld [vmem:[%s4] sm:$0x1]
    %v81 = vperm.slane %v79, 0
    %vm83 = vcmask 261120
    %v85 = vsel %vm83, %v74, 0
    %87 = vmatpush.msra.mxu0 0.0
    %88 = vmatpush.msra.mxu0 0.0
    %89 = vmatpush.msra.mxu0 0.0
    %90 = vmatpush.msra.mxu0 0.0
    %91 = vmatpush.msra.mxu0 0.0
    %92 = vmatpush.msra.mxu0 0.0
    %93 = vmatpush.msra.mxu0 0.0
    %94 = vmatpush.msra.mxu0 0.0
    %95 = vmatpush.msra.mxu0 0.0
    %96 = vmatpush.msra.mxu0 0.0
    %97 = vmatpush.msra.mxu0 0.0
    %98 = vmatpush.msra.mxu0 0.0
    %99 = vmatpush.msra.mxu0 %v78
    %100 = vmatpush.msra.mxu0 %v77
    %101 = vmatpush.msra.mxu0 %v76
    %102 = vmatpush.msra.mxu0 %v75
    %103 = vmatmul.f32.gmra.mxu0 %v85
    %v104 = vpop.f32.mrf.mxu0
    %v105 = vadd.f32 %v81, %v104
    %106 = vdwg.mxu0
    %v107 = vmax.f32 %v105, 0.0
    %v108 = vld [vmem:[%s5] sm:$0xff]
    %v109 = vld [vmem:[%s5 + $0x8] sm:$0xff]
    %v110 = vld [vmem:[%s5 + $0x10] sm:$0xff]
    %v111 = vld [vmem:[%s5 + $0x18] sm:$0xff]
    %v112 = vld [vmem:[%s6] sm:$0x1]
    %v114 = vperm.slane %v112, 0
    %v117 = vsel %vm83, %v107, 0
    %119 = vmatpush.msra.mxu0 0.0
    %120 = vmatpush.msra.mxu0 0.0
    %121 = vmatpush.msra.mxu0 0.0
    %122 = vmatpush.msra.mxu0 0.0
    %123 = vmatpush.msra.mxu0 0.0
    %124 = vmatpush.msra.mxu0 0.0
    %125 = vmatpush.msra.mxu0 0.0
    %126 = vmatpush.msra.mxu0 0.0
    %127 = vmatpush.msra.mxu0 0.0
    %128 = vmatpush.msra.mxu0 0.0
    %129 = vmatpush.msra.mxu0 0.0
    %130 = vmatpush.msra.mxu0 0.0
    %131 = vmatpush.msra.mxu0 %v111
    %132 = vmatpush.msra.mxu0 %v110
    %133 = vmatpush.msra.mxu0 %v109
    %134 = vmatpush.msra.mxu0 %v108
    %135 = vmatmul.f32.gmra.mxu0 %v117
    %v136 = vpop.f32.mrf.mxu0
    %v137 = vadd.f32 %v114, %v136
    %138 = vdwg.mxu0
    %vm139 = vcmask 64512
    %140 = vst.msk [vmem:[#allocation5] sm:$0xff] %vm139, %v137
    // Predicated region
    $region34: #{tpu_custom_call.1} parent=1 // pred_check
      _
    $region35: #{tpu_custom_call.1} parent=1 // pred_check_branch
      %142 = sbr.rel (0) target = $region37
    $region36: #{tpu_custom_call.1} parent=1 // pred_region
      %144 = vsyncadd [#allocation4], 0
      %s146 = sshll.u32 [#allocation5], 4
      %s147 = int_to_ptr.vmem [resolvable:$true] %s146
      %s148 = sshll.u32 %s7, 4
      %s149 = int_to_ptr.hbm [resolvable:$true] %s148
      %151 = dma.vmem_to_hbm [thread:$0]  %s147, 128, %s149, [#allocation4]
    $region37: #{tpu_custom_call.1} parent=1 // pred_fallthru
      _
    // Predicated region
    $region38: #{tpu_custom_call.1} parent=1 // pred_check
      _
    $region39: #{tpu_custom_call.1} parent=1 // pred_check_branch
      %153 = sbr.rel (0) target = $region41
    $region40: #{tpu_custom_call.1} parent=1 // pred_region
      %155 = dma.done [#allocation4], 128
    $region41: #{tpu_custom_call.1} parent=1 // pred_fallthru
      _
    %156 = vsyncpa [#allocation3], 1
    %157 = vsyncpa [#allocation4], 1

</llo_original>
